<compile_context>
chip_gen: v5e
topology: v5e:2x2
jax: 0.10.0
libtpu: 0.0.40
codegen_flags: <defaults>
</compile_context>

<pallas_src>
import functools

import jax
import jax.numpy as jnp
from jax.experimental import pallas as pl
from jax.experimental.pallas import tpu as pltpu


def _round_up(x, m):
    return ((x + m - 1) // m) * m


def _rbf_kernel(x_ref, yt_ref, gx_ref, gy_ref, o_ref, *, two_gamma):
    # x_ref: (tm, D), yt_ref: (D, tn) in the matmul dtype.
    # gx_ref: (tm, 1) f32 = -gamma*||x||^2 ; gy_ref: (1, tn) f32 = -gamma*||y||^2.
    xy = jnp.dot(x_ref[...], yt_ref[...],
                 preferred_element_type=jnp.float32)            # (tm, tn) f32 on MXU
    o_ref[...] = jnp.exp(two_gamma * xy + gx_ref[...] + gy_ref[...]).astype(o_ref.dtype)


def _vmem_ceiling_bytes():
    """Per-generation usable VMEM ceiling (~48 MiB on v7x, ~96 MiB on v5e/v6e)."""
    cap = 64 << 20  # conservative default = v7x physical per-TC VMEM
    try:
        cap = int(pltpu.get_tpu_info().vmem_capacity_bytes)
    except Exception:
        pass
    return min(cap * 3 // 4, 100 << 20)


def _vmem_need_bytes(tm, tn, d, in_itemsize, out_itemsize):
    # Double-buffered input slabs + norm strips, double-buffered out tile,
    # in-kernel f32 temporaries (Gram tile + exp result before cast).
    in_bufs = 2 * (tm * d + d * tn) * in_itemsize + 2 * (tm + tn) * 4
    out_bufs = 2 * tm * tn * out_itemsize
    temps = 2 * tm * tn * 4
    return in_bufs + out_bufs + temps


def rbf_forward(X, Y, n, sigma=None, *, tm=256, tn=512,
                matmul_in_bf16=False, out_dtype=jnp.float32):
    """Pallas implementation of RBF.forward.

    X: (N, D), Y: (M, D). Returns K_XY of shape (N, M) in `out_dtype`.
    """
    N, D = X.shape
    M, Dy = Y.shape
    assert D == Dy, "feature dims of X and Y must match"

    if sigma is None:
        sigma_val = 10.0 ** int(1 - n)
    else:
        sigma_val = float(sigma)
    gamma = 1.0 / (1e-08 + 2.0 * sigma_val ** 2)   # static hyperparameter

    # One-time O((N+M)*D) precompute: gamma-folded row norms.
    gx = (-gamma) * jnp.sum(jnp.square(X.astype(jnp.float32)), axis=1,
                            keepdims=True)                       # (N, 1) f32
    gy = (-gamma) * jnp.sum(jnp.square(Y.astype(jnp.float32)), axis=1,
                            keepdims=True).T                     # (1, M) f32, lane-major

    # One-time transpose so the streaming RHS tile is already (D, tn).
    Yt = Y.T                                                     # (D, M)
    Xm, Ytm = X, Yt
    if matmul_in_bf16 and X.dtype == jnp.float32:
        Xm, Ytm = X.astype(jnp.bfloat16), Yt.astype(jnp.bfloat16)

    # Tile selection: full-extent blocks for small dims (always legal),
    # otherwise sublane/lane-aligned tiles; ragged edges use masked stores.
    tm = N if N <= tm else _round_up(tm, 8)
    tn = M if M <= tn else _round_up(tn, 128)

    in_itemsize = jnp.dtype(Xm.dtype).itemsize
    out_itemsize = jnp.dtype(out_dtype).itemsize
    ceiling = _vmem_ceiling_bytes()
    while (_vmem_need_bytes(tm, tn, D, in_itemsize, out_itemsize) > ceiling
           and (tm > 8 or tn > 128)):
        if tn > 128:
            tn = max(128, _round_up(tn // 2, 128))
        else:
            tm = max(8, _round_up(tm // 2, 8))

    vmem_limit = int(min(
        ceiling,
        max(_vmem_need_bytes(tm, tn, D, in_itemsize, out_itemsize) * 5 // 4,
            16 << 20)))

    grid = (pl.cdiv(N, tm), pl.cdiv(M, tn))

    return pl.pallas_call(
        functools.partial(_rbf_kernel, two_gamma=2.0 * gamma),
        out_shape=jax.ShapeDtypeStruct((N, M), out_dtype),
        grid=grid,
        in_specs=[
            pl.BlockSpec((tm, D), lambda i, j: (i, 0)),   # X rows (reused over j)
            pl.BlockSpec((D, tn), lambda i, j: (0, j)),   # Y^T cols (streamed)
            pl.BlockSpec((tm, 1), lambda i, j: (i, 0)),   # -gamma*||x||^2
            pl.BlockSpec((1, tn), lambda i, j: (0, j)),   # -gamma*||y||^2 (lane-major)
        ],
        out_specs=pl.BlockSpec((tm, tn), lambda i, j: (i, j)),
        compiler_params=pltpu.CompilerParams(
            dimension_semantics=("parallel", "parallel"),
            vmem_limit_bytes=vmem_limit,
        ),
    )(Xm, Ytm, gx, gy)


def rbf_reference(X, Y, n, sigma=None):
    """Pure-JAX reference mirroring the PyTorch forward exactly."""
    XX = X @ X.T
    XY = X @ Y.T
    YY = Y @ Y.T
    dnorm2 = -2.0 * XY + jnp.diag(XX)[:, None] + jnp.diag(YY)[None, :]
    if sigma is None:
        s = 10.0 ** int(1 - n)
    else:
        s = sigma
    gamma = 1.0 / (1e-08 + 2.0 * s ** 2)
    return jnp.exp(-gamma * dnorm2)


if __name__ == "__main__":
    key = jax.random.PRNGKey(0)
    kx, ky = jax.random.split(key)

    # Small shapes consistent with the module: X, Y are (num_samples, dim).
    N, M, D = 16, 16, 32
    X = jax.random.normal(kx, (N, D), dtype=jnp.float32)
    Y = jax.random.normal(ky, (M, D), dtype=jnp.float32)

    # Default-module path: RBF(n=2) -> sigma = 10 ** (1 - 2) = 0.1.
    out = jax.block_until_ready(rbf_forward(X, Y, n=2, sigma=None))
    ref = rbf_reference(X, Y, n=2, sigma=None)
    assert out.shape == (N, M)
    assert jnp.allclose(out, ref, atol=1e-4, rtol=1e-4), "mismatch (sigma=None)"

    # Explicit-sigma path with non-underflowed kernel values.
    out2 = jax.block_until_ready(rbf_forward(X, Y, n=2, sigma=4.0))
    ref2 = rbf_reference(X, Y, n=2, sigma=4.0)
    assert jnp.allclose(out2, ref2, atol=1e-4, rtol=1e-4), "mismatch (sigma=4.0)"

    print("KERNEL_OK")
</pallas_src>

<mosaic_0001>
module attributes {stable_mosaic.version = 11 : i64} {
  func.func @_rbf_kernel(%arg0: i32, %arg1: i32, %arg2: memref<16x32xf32, #tpu.memory_space<vmem>>, %arg3: memref<32x16xf32, #tpu.memory_space<vmem>>, %arg4: memref<16x1xf32, #tpu.memory_space<vmem>>, %arg5: memref<1x16xf32, #tpu.memory_space<vmem>>, %arg6: memref<16x16xf32, #tpu.memory_space<vmem>>) attributes {dimension_semantics = [#tpu.dimension_semantics<parallel>, #tpu.dimension_semantics<parallel>], iteration_bounds = array<i64: 1, 1>, scalar_prefetch = 0 : i64, scratch_operands = 0 : i64, tpu.core_type = #tpu.core_type<tc>, window_params = [{transform_indices = @transform_0, window_bounds = array<i64: 16, 32>}, {transform_indices = @transform_1, window_bounds = array<i64: 32, 16>}, {transform_indices = @transform_2, window_bounds = array<i64: 16, 1>}, {transform_indices = @transform_3, window_bounds = array<i64: 1, 16>}, {transform_indices = @transform_4, window_bounds = array<i64: 16, 16>}]} {
    %c0 = arith.constant 0 : index
    %c0_0 = arith.constant 0 : index
    %0 = vector.load %arg2[%c0, %c0_0] : memref<16x32xf32, #tpu.memory_space<vmem>>, vector<16x32xf32>
    %c0_1 = arith.constant 0 : index
    %c0_2 = arith.constant 0 : index
    %1 = vector.load %arg3[%c0_1, %c0_2] : memref<32x16xf32, #tpu.memory_space<vmem>>, vector<32x16xf32>
    %cst = arith.constant dense<0.000000e+00> : vector<16x16xf32>
    %2 = tpu.matmul %0, %1, %cst {dimension_numbers = #tpu.dot_dimension_numbers<[1], [0], [0], [1], [0, 0, 1, 1], [], []>} : vector<16x32xf32>, vector<32x16xf32>, vector<16x16xf32> -> vector<16x16xf32>
    %cst_3 = arith.constant 99.9999465 : f32
    %3 = vector.broadcast %cst_3 : f32 to vector<16x16xf32>
    %4 = arith.mulf %3, %2 : vector<16x16xf32>
    %c0_4 = arith.constant 0 : index
    %c0_5 = arith.constant 0 : index
    %5 = vector.load %arg4[%c0_4, %c0_5] : memref<16x1xf32, #tpu.memory_space<vmem>>, vector<16x1xf32>
    %6 = vector.broadcast %5 : vector<16x1xf32> to vector<16x16xf32>
    %7 = arith.addf %4, %6 : vector<16x16xf32>
    %c0_6 = arith.constant 0 : index
    %c0_7 = arith.constant 0 : index
    %8 = vector.load %arg5[%c0_6, %c0_7] : memref<1x16xf32, #tpu.memory_space<vmem>>, vector<1x16xf32>
    %9 = vector.broadcast %8 : vector<1x16xf32> to vector<16x16xf32>
    %10 = arith.addf %7, %9 : vector<16x16xf32>
    %11 = math.exp %10 : vector<16x16xf32>
    %c0_8 = arith.constant 0 : index
    %c0_9 = arith.constant 0 : index
    %12 = vector.load %arg6[%c0_8, %c0_9] : memref<16x16xf32, #tpu.memory_space<vmem>>, vector<16x16xf32>
    tpu.vector_store %arg6[%c0_8, %c0_9], %11 {strides = array<i32>} : memref<16x16xf32, #tpu.memory_space<vmem>>, vector<16x16xf32>,
    return
  }
  func.func @transform_0(%arg0: i32, %arg1: i32) -> (i32, i32) {
    %c0_i32 = arith.constant 0 : i32
    %c0_i32_0 = arith.constant 0 : i32
    return %arg0, %c0_i32 : i32, i32
  }
  func.func @transform_1(%arg0: i32, %arg1: i32) -> (i32, i32) {
    %c0_i32 = arith.constant 0 : i32
    %c0_i32_0 = arith.constant 0 : i32
    return %c0_i32, %arg1 : i32, i32
  }
  func.func @transform_2(%arg0: i32, %arg1: i32) -> (i32, i32) {
    %c0_i32 = arith.constant 0 : i32
    %c0_i32_0 = arith.constant 0 : i32
    return %arg0, %c0_i32 : i32, i32
  }
  func.func @transform_3(%arg0: i32, %arg1: i32) -> (i32, i32) {
    %c0_i32 = arith.constant 0 : i32
    %c0_i32_0 = arith.constant 0 : i32
    return %c0_i32, %arg1 : i32, i32
  }
  func.func @transform_4(%arg0: i32, %arg1: i32) -> (i32, i32) {
    %c0_i32 = arith.constant 0 : i32
    return %arg0, %arg1 : i32, i32
  }
}

</mosaic_0001>

<llo_original>
// kernel: tpu_custom_call.1
$region0: #{tpu_custom_call.1}
  #allocation0 [shape = 'u32[]', space=smem, size = 0x4, offset = 0x4, fixed_abs, tag = 'smem constant byte address 0x4 - core index']
  #allocation1 [shape = 'u32[72,128]{1,0:T(1,128)}', space=vmem, size = 0x9000, scoped, tag = 'internal scratch']
  %s0 = inlined_call_operand.vmem [shape: f32[16,32], index: 0, kind: input, shape index: {}]
  %s1 = inlined_call_operand.vmem [shape: f32[32,16], index: 1, kind: input, shape index: {}]
  %s2 = inlined_call_operand.vmem [shape: f32[16,1], index: 2, kind: input, shape index: {}]
  %s3 = inlined_call_operand.vmem [shape: f32[1,16], index: 3, kind: input, shape index: {}]
  %s4 = inlined_call_operand.hbm [shape: f32[16,16], index: 4, kind: output, shape index: {}]
  %s5 = sld [smem:[#allocation0]]
  $region26: #{tpu_custom_call.1} parent=0
    _
  %s7 = ssub.s32 1, %s5
  %s8 = scalar_select 0, %s7, %s5
  $region1: #{tpu_custom_call.1} parent=0
    #allocation2 [shape = 'u8[8192]{0}', space=vmem, size = 0x2000, scoped, tag = 'output window, operand 0, single buffered']
    #allocation3 [shape = 's32[1]{0}', space=sflag, size = 0x4, scoped, tag = 'scoped memory for tpu_custom_call.1']
    %9 = vsyncpa [#allocation3], 0
    // Predicated region
    $region2: #{tpu_custom_call.1} parent=1 // pred_check
      _
    $region3: #{tpu_custom_call.1} parent=1 // pred_check_branch
      %11 = sbr.rel (0) target = $region5
    $region4: #{tpu_custom_call.1} parent=1 // pred_region
      _
    $region5: #{tpu_custom_call.1} parent=1 // pred_fallthru
      _
    // Predicated region
    $region6: #{tpu_custom_call.1} parent=1 // pred_check
      _
    $region7: #{tpu_custom_call.1} parent=1 // pred_check_branch
      %13 = sbr.rel (0) target = $region9
    $region8: #{tpu_custom_call.1} parent=1 // pred_region
      _
    $region9: #{tpu_custom_call.1} parent=1 // pred_fallthru
      _
    // Predicated region
    $region10: #{tpu_custom_call.1} parent=1 // pred_check
      _
    $region11: #{tpu_custom_call.1} parent=1 // pred_check_branch
      %15 = sbr.rel (0) target = $region13
    $region12: #{tpu_custom_call.1} parent=1 // pred_region
      _
    $region13: #{tpu_custom_call.1} parent=1 // pred_fallthru
      _
    // Predicated region
    $region14: #{tpu_custom_call.1} parent=1 // pred_check
      _
    $region15: #{tpu_custom_call.1} parent=1 // pred_check_branch
      %17 = sbr.rel (0) target = $region17
    $region16: #{tpu_custom_call.1} parent=1 // pred_region
      _
    $region17: #{tpu_custom_call.1} parent=1 // pred_fallthru
      _
    %v18 = vld [vmem:[%s0] sm:$0xff]
    %v19 = vld [vmem:[%s0 + $0x8] sm:$0xff]
    %v20 = vld [vmem:[%s1] sm:$0xff]
    %v21 = vld [vmem:[%s1 + $0x8] sm:$0xff]
    %v22 = vld [vmem:[%s1 + $0x10] sm:$0xff]
    %v23 = vld [vmem:[%s1 + $0x18] sm:$0xff]
    %vm24 = vcmask 261120
    %v26 = vsel %vm24, %v18, 0
    %v29 = vsel %vm24, %v19, 0
    %31 = vmatpush.msra.mxu0 0.0
    %32 = vmatpush.msra.mxu0 0.0
    %33 = vmatpush.msra.mxu0 0.0
    %34 = vmatpush.msra.mxu0 0.0
    %35 = vmatpush.msra.mxu0 0.0
    %36 = vmatpush.msra.mxu0 0.0
    %37 = vmatpush.msra.mxu0 0.0
    %38 = vmatpush.msra.mxu0 0.0
    %39 = vmatpush.msra.mxu0 0.0
    %40 = vmatpush.msra.mxu0 0.0
    %41 = vmatpush.msra.mxu0 0.0
    %42 = vmatpush.msra.mxu0 0.0
    %43 = vmatpush.msra.mxu0 %v23
    %44 = vmatpush.msra.mxu0 %v22
    %45 = vmatpush.msra.mxu0 %v21
    %46 = vmatpush.msra.mxu0 %v20
    %47 = vmatmul.f32.gmra.mxu0 %v26
    %v48 = vpop.f32.mrf.mxu0
    %v49 = vadd.f32 0.0, %v48
    %50 = vmatmul.f32.gmra.mxu0 %v29
    %v51 = vpop.f32.mrf.mxu0
    %v52 = vadd.f32 0.0, %v51
    %53 = vdwg.mxu0
    %v54 = vmul.f32 %v49, 99.99995
    %v55 = vmul.f32 %v52, 99.99995
    %v56 = vld [vmem:[%s2] sm:$0xff]
    %v57 = vld [vmem:[%s2 + $0x8] sm:$0xff]
    %59 = vset.pattern.permute.xlu0 0
    %60 = vperm.xlu0 %59, %v56
    %v61 = vpop.permute.xlu0 %60
    %64 = vset.pattern.permute.xlu0 0
    %65 = vperm.xlu0 %64, %v57
    %v66 = vpop.permute.xlu0 %65
    %v68 = vadd.f32 %v54, %v61
    %v69 = vadd.f32 %v55, %v66
    %v70 = vld [vmem:[%s3] sm:$0x1]
    %v72 = vperm.slane %v70, 0
    %v74 = vadd.f32 %v68, %v72
    %v75 = vadd.f32 %v69, %v72
    %v76 = vmul.f32 %v74, 1.442695
    %v77 = vpow.pop %v76
    %v78 = vmul.f32 %v75, 1.442695
    %v79 = vpow.pop %v78
    %vm80 = vcmask 130048
    %81 = vst.msk [vmem:[#allocation2] sm:$0xff] %vm80, %v77
    %82 = vst.msk [vmem:[#allocation2 + $0x8] sm:$0xff] %vm80, %v79
    // Predicated region
    $region18: #{tpu_custom_call.1} parent=1 // pred_check
      _
    $region19: #{tpu_custom_call.1} parent=1 // pred_check_branch
      %84 = sbr.rel (0) target = $region21
    $region20: #{tpu_custom_call.1} parent=1 // pred_region
      %86 = vsyncadd [#allocation3], 0
      %s87 = sshll.u32 [#allocation2], 4
      %s88 = int_to_ptr.vmem [resolvable:$true] %s87
      %s89 = sshll.u32 %s4, 4
      %s90 = int_to_ptr.hbm [resolvable:$true] %s89
      %95 = dma.vmem_to_hbm [thread:$0]  %s88, 256, %s90, [#allocation3], 128, 128, 8
    $region21: #{tpu_custom_call.1} parent=1 // pred_fallthru
      _
    // Predicated region
    $region22: #{tpu_custom_call.1} parent=1 // pred_check
      _
    $region23: #{tpu_custom_call.1} parent=1 // pred_check_branch
      %97 = sbr.rel (0) target = $region25
    $region24: #{tpu_custom_call.1} parent=1 // pred_region
      %99 = dma.done [#allocation3], 256
    $region25: #{tpu_custom_call.1} parent=1 // pred_fallthru
      _
    %100 = vsyncpa [#allocation3], 1

</llo_original>
